<compile_context>
chip_gen: v5e
topology: v5e:2x2
jax: 0.10.0
libtpu: 0.0.40
codegen_flags: <defaults>
</compile_context>

<pallas_src>
import functools

import jax
import jax.numpy as jnp
from jax.experimental import pallas as pl
from jax.experimental.pallas import tpu as pltpu

BN_EPS = 1e-5
VMEM_LIMIT_BYTES = 48 * 1024 * 1024   # <= 48 MiB: fits v7x's 64 MiB physical VMEM
MAX_TM_POOL = 512
NEG_BIG = -1e30                        # maxpool padding value (acts as -inf, bf16-safe)


def _round_up(a, b):
    return -(-a // b) * b


def _pick_max_tm(cout):
    """Bigger row tiles amortize per-grid-step overhead; cap by cout so the f32
    epilogue tile + double-buffered weight slab stay modest on v7x's 64 MiB VMEM."""
    if cout <= 128:
        return 2048
    if cout <= 256:
        return 1024
    return 512


def _tile_rows(m_wide, max_tm):
    nt = -(-m_wide // max_tm)
    tm = _round_up(-(-m_wide // nt), 16)      # multiple of 16 (bf16 sublane packing)
    m_pad = _round_up(m_wide, tm)
    return tm, m_pad


# ----------------------------------------------------------------------------------
# Pallas kernels
# ----------------------------------------------------------------------------------
def _conv_kernel(*refs, taps, tm, single_tile, has_bias, pre_relu, post_relu,
                 has_down, down_tap, has_res):
    """K-packed implicit-im2col conv with fused epilogue (+ optional fused 1x1 downsample).

    refs = x_slab, w_cat, scale, shift, [bias], [wd, scale_d, shift_d], [residual],
           out, [out_down]
      x_slab : (1, P, L, Kdim) bf16  VMEM-resident flattened, dj-channel-packed input
      w_cat  : (ntaps, Kdim, Cout) bf16
      out    : (1, TM, Cout) bf16 on the "widened" output grid
    """
    it = iter(refs)
    x_ref, w_ref, sc_ref, sh_ref = next(it), next(it), next(it), next(it)
    b_ref = next(it) if has_bias else None
    if has_down:
        wd_ref, scd_ref, shd_ref = next(it), next(it), next(it)
    res_ref = next(it) if has_res else None
    o_ref = next(it)
    od_ref = next(it) if has_down else None

    if single_tile:
        f0 = 0                                           # fully static slicing path
    else:
        f0 = pl.multiple_of(pl.program_id(1) * tm, 8)

    # <=3 packed-K dots; accumulate in a local value, write the output exactly once.
    acc = None
    a_down = None
    for idx, (p, off) in enumerate(taps):
        a = x_ref[0, p, pl.ds(f0 + off, tm), :]          # (TM, Kdim) bf16
        part = jnp.dot(a, w_ref[idx], preferred_element_type=jnp.float32)
        acc = part if acc is None else acc + part
        if has_down and idx == down_tap:
            a_down = a                                   # reuse for the fused 1x1 downsample

    y = acc
    if has_bias:
        y = y + b_ref[...]                               # layer0 conv bias (before ReLU)
    if pre_relu:                                         # layer0: ReLU before BN
        y = jnp.maximum(y, 0.0)
    y = y * sc_ref[...] + sh_ref[...]                    # folded BatchNorm (f32 epilogue)
    if has_res:
        y = y + res_ref[0, :, :].astype(jnp.float32)     # fused residual add
    if post_relu:
        y = jnp.maximum(y, 0.0)
    o_ref[0, :, :] = y.astype(o_ref.dtype)

    if has_down:
        # 1x1/stride-s downsample: one extra dot on an operand that is already loaded
        # (only the dj=pad channel block of wd_ref is non-zero).
        yd = jnp.dot(a_down, wd_ref[...], preferred_element_type=jnp.float32)
        yd = yd * scd_ref[...] + shd_ref[...]
        od_ref[0, :, :] = yd.astype(od_ref.dtype)


def _pool_kernel(x_ref, o_ref, *, taps, tm, single_tile):
    """3x3/2 maxpool as an in-kernel 9-tap running max (no stacked windows in HBM)."""
    if single_tile:
        f0 = 0
    else:
        f0 = pl.multiple_of(pl.program_id(1) * tm, 8)
    p0, off0 = taps[0]
    m = x_ref[0, p0, pl.ds(f0 + off0, tm), :]
    for p, off in taps[1:]:
        m = jnp.maximum(m, x_ref[0, p, pl.ds(f0 + off, tm), :])
    o_ref[0, :, :] = m


# ----------------------------------------------------------------------------------
# Host-side layout prep (pure rearrangement; no per-tap HBM blow-up beyond the dj pack)
# ----------------------------------------------------------------------------------
def _prep_conv(x, k, s, pad, max_tm, full_pack, pad_value=0.0):
    """Pad + dj-channel-pack (or full im2col) + row-phase-decompose + flatten NHWC input.

    Returns (slab (N, P, L, Kdim), taps [(phase, flat_offset)], meta).
    Tap di of the conv reads slab[phase][f + offset] for widened output flat index
    f = r * wph + c; the Kdim channel axis already carries the dj (and, for full_pack,
    di) taps so the kernel does only len(taps) dots.
    """
    n, hi, wi, c = x.shape
    ho = (hi + 2 * pad - k) // s + 1
    wo = (wi + 2 * pad - k) // s + 1
    wph = _round_up(wo, 8)                              # widened width; di*wph offsets aligned
    wp_tot = max(wi + 2 * pad, s * (wph - 1) + k)
    if full_pack:
        hp_tot = max(hi + 2 * pad, s * (ho - 1) + k)
        hph = None
    else:
        hph = max(-(-(hi + 2 * pad) // s), ho + (k - 1) // s)
        hp_tot = s * hph
    xp = jnp.pad(x, ((0, 0), (pad, hp_tot - hi - pad), (pad, wp_tot - wi - pad), (0, 0)),
                 constant_values=pad_value)

    if full_pack:
        # Full im2col (layer0: Cin=4 -> K=196 single dot per tile).
        cols = [xp[:, di:di + s * (ho - 1) + 1:s, dj:dj + s * (wph - 1) + 1:s, :]
                for di in range(k) for dj in range(k)]
        slab = jnp.concatenate(cols, axis=-1).reshape(n, 1, ho * wph, k * k * c)
        taps = [(0, 0)]
        flat_rows = ho * wph
    else:
        # dj-channel packing: channels -> k*c; row-phase decomposition handles the stride.
        cols = [xp[:, :, dj:dj + s * (wph - 1) + 1:s, :] for dj in range(k)]
        xc = jnp.concatenate(cols, axis=-1)             # (n, hp_tot, wph, k*c)
        xc = xc.reshape(n, hph, s, wph, k * c).transpose(0, 2, 1, 3, 4)
        slab = xc.reshape(n, s, hph * wph, k * c)
        taps = [(di % s, (di // s) * wph) for di in range(k)]
        flat_rows = hph * wph

    m_wide = ho * wph                                   # widened-output rows
    tm, m_pad = _tile_rows(m_wide, max_tm)
    max_off = max(off for _, off in taps)
    flat_len = max(m_pad + max_off, flat_rows)          # slack so no dynamic read goes OOB
    slab = jnp.pad(slab, ((0, 0), (0, 0), (0, flat_len - flat_rows), (0, 0)),
                   constant_values=pad_value)
    meta = dict(ho=ho, wo=wo, wph=wph, tm=tm, m_pad=m_pad)
    return slab, taps, meta


def _prep_pool(x, k, s, pad, max_tm, pad_value):
    """Per-tap (s*s phase) layout for the maxpool (max can't be K-packed into a dot)."""
    n, hi, wi, c = x.shape
    ho = (hi + 2 * pad - k) // s + 1
    wo = (wi + 2 * pad - k) // s + 1
    wph = _round_up(max(wo + (k - 1) // s, -(-(wi + 2 * pad) // s)), 8)
    hph = max(ho + (k - 1) // s, -(-(hi + 2 * pad) // s))
    xp = jnp.pad(x, ((0, 0), (pad, s * hph - hi - pad), (pad, s * wph - wi - pad), (0, 0)),
                 constant_values=pad_value)
    ph = xp.reshape(n, hph, s, wph, s, c).transpose(0, 2, 4, 1, 3, 5)
    ph = ph.reshape(n, s * s, hph * wph, c)
    taps = [((di % s) * s + (dj % s), (di // s) * wph + (dj // s))
            for di in range(k) for dj in range(k)]
    m_wide = ho * wph
    tm, m_pad = _tile_rows(m_wide, max_tm)
    max_off = max(off for _, off in taps)
    flat_len = max(m_pad + max_off, hph * wph)
    ph = jnp.pad(ph, ((0, 0), (0, 0), (0, flat_len - hph * wph), (0, 0)),
                 constant_values=pad_value)
    meta = dict(ho=ho, wo=wo, wph=wph, tm=tm, m_pad=m_pad)
    return ph, taps, meta


def _narrow(y_flat, n, cout, meta):
    """Widened flat output (N, m_pad, C) -> true NHWC (N, Ho, Wo, C)."""
    y = y_flat[:, : meta["ho"] * meta["wph"], :]
    y = y.reshape(n, meta["ho"], meta["wph"], cout)
    return y[:, :, : meta["wo"], :]


def _widen_flat(x_nhwc, wph, m_pad):
    """NHWC residual -> widened flat layout matching the conv kernel's output grid."""
    n, h, w, c = x_nhwc.shape
    xw = jnp.pad(x_nhwc, ((0, 0), (0, 0), (0, wph - w), (0, 0)))
    xf = xw.reshape(n, h * wph, c)
    return jnp.pad(xf, ((0, 0), (0, m_pad - h * wph), (0, 0)))


# ----------------------------------------------------------------------------------
# Pallas wrappers
# ----------------------------------------------------------------------------------
def conv_bn_act(x, w_hwio, bias, scale, shift, *, stride, pad, pre_relu, post_relu,
                residual=None, downsample=None, full_pack=False):
    """Fused conv + (bias) + (ReLU) + folded-BN + (residual add) + (ReLU).

    `downsample=(w1x1, scale_d, shift_d)` fuses the block's 1x1/stride-s projection into
    the same kernel (second output).  bf16 activations/weights, f32 epilogue.
    """
    n, hi, wi, cin = x.shape
    k, k2, cin_w, cout = w_hwio.shape
    assert k == k2 and cin_w == cin

    slab, taps, meta = _prep_conv(x, k, stride, pad, _pick_max_tm(cout), full_pack)
    tm, m_pad, wph = meta["tm"], meta["m_pad"], meta["wph"]
    P, L, kdim = slab.shape[1], slab.shape[2], slab.shape[3]
    grid_m = m_pad // tm

    scale = scale.reshape(1, cout).astype(jnp.float32)
    shift = shift.reshape(1, cout).astype(jnp.float32)
    # Statically gate the bias: only layer0 carries one (and it sits before the ReLU);
    # a bias with no pre-ReLU would fold into the BN shift on the host.
    has_bias = (bias is not None) and pre_relu
    if (bias is not None) and not pre_relu:
        shift = shift + scale * bias.reshape(1, cout).astype(jnp.float32)

    if full_pack:
        w_cat = w_hwio.astype(jnp.bfloat16).reshape(1, k * k * cin, cout)
    else:
        w_cat = w_hwio.astype(jnp.bfloat16).reshape(k, k * cin, cout)

    in_specs = [
        pl.BlockSpec((1, P, L, kdim), lambda bi, t: (bi, 0, 0, 0)),        # resident slab
        pl.BlockSpec(w_cat.shape, lambda bi, t: (0, 0, 0)),                # resident weights
        pl.BlockSpec((1, cout), lambda bi, t: (0, 0)),                     # BN scale
        pl.BlockSpec((1, cout), lambda bi, t: (0, 0)),                     # BN shift
    ]
    args = [slab, w_cat, scale, shift]

    if has_bias:
        args.append(bias.reshape(1, cout).astype(jnp.float32))
        in_specs.append(pl.BlockSpec((1, cout), lambda bi, t: (0, 0)))

    has_down = downsample is not None
    down_tap = -1
    cout_d = 0
    if has_down:
        assert (not full_pack) and 0 <= pad < k
        wd, scd, shd = downsample
        cout_d = wd.shape[-1]
        down_tap = pad                                  # the di=pad tap is loaded anyway
        wdf = jnp.zeros((k * cin, cout_d), jnp.float32)
        wdf = wdf.at[pad * cin:(pad + 1) * cin, :].set(wd.reshape(cin, cout_d))
        args += [wdf.astype(jnp.bfloat16),
                 scd.reshape(1, cout_d).astype(jnp.float32),
                 shd.reshape(1, cout_d).astype(jnp.float32)]
        in_specs += [pl.BlockSpec((k * cin, cout_d), lambda bi, t: (0, 0)),
                     pl.BlockSpec((1, cout_d), lambda bi, t: (0, 0)),
                     pl.BlockSpec((1, cout_d), lambda bi, t: (0, 0))]

    has_res = residual is not None
    if has_res:
        res = _widen_flat(residual, wph, m_pad).astype(jnp.bfloat16)
        args.append(res)
        in_specs.append(pl.BlockSpec((1, tm, cout), lambda bi, t: (bi, t, 0)))

    out_specs = pl.BlockSpec((1, tm, cout), lambda bi, t: (bi, t, 0))
    out_shape = jax.ShapeDtypeStruct((n, m_pad, cout), jnp.bfloat16)
    if has_down:
        out_specs = (out_specs, pl.BlockSpec((1, tm, cout_d), lambda bi, t: (bi, t, 0)))
        out_shape = (out_shape, jax.ShapeDtypeStruct((n, m_pad, cout_d), jnp.bfloat16))

    kernel = functools.partial(
        _conv_kernel, taps=taps, tm=tm, single_tile=(grid_m == 1), has_bias=has_bias,
        pre_relu=pre_relu, post_relu=post_relu, has_down=has_down, down_tap=down_tap,
        has_res=has_res)

    out = pl.pallas_call(
        kernel,
        grid=(n, grid_m),
        in_specs=in_specs,
        out_specs=out_specs,
        out_shape=out_shape,
        compiler_params=pltpu.CompilerParams(
            dimension_semantics=("parallel", "parallel"),
            vmem_limit_bytes=VMEM_LIMIT_BYTES),
    )(*args)

    if has_down:
        y, yd = out
        return _narrow(y, n, cout, meta), _narrow(yd, n, cout_d, meta)
    return _narrow(out, n, cout, meta)


def maxpool_3x3_s2(x):
    """MaxPool2d(kernel=3, stride=2, padding=1) as a fused 9-tap running max."""
    n, hi, wi, c = x.shape
    ph, taps, meta = _prep_pool(x, 3, 2, 1, MAX_TM_POOL, NEG_BIG)
    tm, m_pad = meta["tm"], meta["m_pad"]
    P, L = ph.shape[1], ph.shape[2]
    grid_m = m_pad // tm
    kernel = functools.partial(_pool_kernel, taps=taps, tm=tm, single_tile=(grid_m == 1))
    y = pl.pallas_call(
        kernel,
        grid=(n, grid_m),
        in_specs=[pl.BlockSpec((1, P, L, c), lambda bi, t: (bi, 0, 0, 0))],
        out_specs=pl.BlockSpec((1, tm, c), lambda bi, t: (bi, t, 0)),
        out_shape=jax.ShapeDtypeStruct((n, m_pad, c), x.dtype),
        compiler_params=pltpu.CompilerParams(
            dimension_semantics=("parallel", "parallel"),
            vmem_limit_bytes=VMEM_LIMIT_BYTES),
    )(ph)
    return _narrow(y, n, c, meta)


# ----------------------------------------------------------------------------------
# Parameters (deterministic init, shapes match torchvision resnet34 basic blocks)
# ----------------------------------------------------------------------------------
LAYER_CFG = [(64, 3, 1), (128, 4, 2), (256, 6, 2), (512, 3, 2)]


def _conv_w(key, kh, kw, cin, cout):
    fan_in = kh * kw * cin
    return jax.random.normal(key, (kh, kw, cin, cout), jnp.float32) / jnp.sqrt(fan_in)


def _bn_init(key, c):
    k1, k2, k3, k4 = jax.random.split(key, 4)
    gamma = 1.0 + 0.1 * jax.random.normal(k1, (c,), jnp.float32)
    beta = 0.1 * jax.random.normal(k2, (c,), jnp.float32)
    mean = 0.1 * jax.random.normal(k3, (c,), jnp.float32)
    var = jax.random.uniform(k4, (c,), jnp.float32, minval=0.5, maxval=1.5)
    return gamma, beta, mean, var


def _bn_fold(bn, eps=BN_EPS):
    gamma, beta, mean, var = bn
    scale = gamma / jnp.sqrt(var + eps)
    shift = beta - scale * mean
    return scale.reshape(1, -1), shift.reshape(1, -1)


def init_resnet34_params(key):
    keys = iter(jax.random.split(key, 256))
    p = {}
    # first conv replaced 7x7x3->64 with 7x7x4->64 (RGBY), per the reference module
    p["conv1_w"] = _conv_w(next(keys), 7, 7, 4, 64)
    p["conv1_b"] = 0.1 * jax.random.normal(next(keys), (64,), jnp.float32)
    p["bn1"] = _bn_init(next(keys), 64)
    layers = []
    cin = 64
    for cout, nblocks, stride in LAYER_CFG:
        blocks = []
        for bi in range(nblocks):
            s = stride if bi == 0 else 1
            blk = {
                "w1": _conv_w(next(keys), 3, 3, cin, cout),
                "bn1": _bn_init(next(keys), cout),
                "w2": _conv_w(next(keys), 3, 3, cout, cout),
                "bn2": _bn_init(next(keys), cout),
                "stride": s,
            }
            if s != 1 or cin != cout:
                blk["wd"] = _conv_w(next(keys), 1, 1, cin, cout)
                blk["bnd"] = _bn_init(next(keys), cout)
            blocks.append(blk)
            cin = cout
        layers.append(blocks)
    p["layers"] = layers
    return p


# ----------------------------------------------------------------------------------
# Forward pass (shared skeleton so the pure-JAX reference mirrors the kernel path)
# ----------------------------------------------------------------------------------
def _forward(params, x_nchw, conv_fn, pool_fn):
    # NCHW (PyTorch convention) -> NHWC, bf16 activations between layers
    x = jnp.transpose(x_nchw.astype(jnp.float32), (0, 2, 3, 1)).astype(jnp.bfloat16)

    # layer0: conv 7x7 /2 (+bias) -> ReLU -> BatchNorm -> MaxPool 3x3 /2 (BN fused in epilogue)
    sc0, sh0 = _bn_fold(params["bn1"])
    x = conv_fn(x, params["conv1_w"], params["conv1_b"], sc0, sh0,
                stride=2, pad=3, pre_relu=True, post_relu=False, full_pack=True)
    x = pool_fn(x)

    # layer1..layer4: ResNet-34 basic blocks; residual add+ReLU fused into conv2's
    # epilogue, the 1x1 downsample fused into conv1's kernel on the strided blocks.
    for blocks in params["layers"]:
        for blk in blocks:
            s = blk["stride"]
            sc1, sh1 = _bn_fold(blk["bn1"])
            sc2, sh2 = _bn_fold(blk["bn2"])
            if "wd" in blk:
                scd, shd = _bn_fold(blk["bnd"])
                out1, identity = conv_fn(
                    x, blk["w1"], None, sc1, sh1, stride=s, pad=1,
                    pre_relu=False, post_relu=True,
                    downsample=(blk["wd"], scd, shd))
            else:
                out1 = conv_fn(x, blk["w1"], None, sc1, sh1, stride=s, pad=1,
                               pre_relu=False, post_relu=True)
                identity = x
            x = conv_fn(out1, blk["w2"], None, sc2, sh2, stride=1, pad=1,
                        pre_relu=False, post_relu=True, residual=identity)

    # back to NCHW like the PyTorch module output
    return jnp.transpose(x.astype(jnp.float32), (0, 3, 1, 2))


def resnet_forward(params, x_nchw):
    return _forward(params, x_nchw, conv_bn_act, maxpool_3x3_s2)


# ----------------------------------------------------------------------------------
# Pure-JAX reference with identical bf16 quantisation points (correctness guard)
# ----------------------------------------------------------------------------------
def _conv_bn_act_ref(x, w, bias, scale, shift, *, stride, pad, pre_relu, post_relu,
                     residual=None, downsample=None, full_pack=False):
    del full_pack
    xf = x.astype(jnp.float32)
    wf = w.astype(jnp.bfloat16).astype(jnp.float32)
    y = jax.lax.conv_general_dilated(
        xf, wf, window_strides=(stride, stride),
        padding=((pad, pad), (pad, pad)),
        dimension_numbers=("NHWC", "HWIO", "NHWC"))
    if bias is not None:
        y = y + bias.reshape(1, 1, 1, -1).astype(jnp.float32)
    if pre_relu:
        y = jnp.maximum(y, 0.0)
    y = y * scale.reshape(1, 1, 1, -1) + shift.reshape(1, 1, 1, -1)
    if residual is not None:
        y = y + residual.astype(jnp.float32)
    if post_relu:
        y = jnp.maximum(y, 0.0)
    y = y.astype(jnp.bfloat16)
    if downsample is None:
        return y
    wd, scd, shd = downsample
    wdf = wd.astype(jnp.bfloat16).astype(jnp.float32)
    yd = jax.lax.conv_general_dilated(
        xf, wdf, window_strides=(stride, stride), padding=((0, 0), (0, 0)),
        dimension_numbers=("NHWC", "HWIO", "NHWC"))
    yd = yd * scd.reshape(1, 1, 1, -1) + shd.reshape(1, 1, 1, -1)
    return y, yd.astype(jnp.bfloat16)


def _maxpool_ref(x):
    xf = x.astype(jnp.float32)
    y = jax.lax.reduce_window(xf, -jnp.inf, jax.lax.max,
                              (1, 3, 3, 1), (1, 2, 2, 1),
                              ((0, 0), (1, 1), (1, 1), (0, 0)))
    return y.astype(jnp.bfloat16)


if __name__ == "__main__":
    key = jax.random.PRNGKey(0)
    k_params, k_x = jax.random.split(key)
    params = init_resnet34_params(k_params)

    # small input consistent with the module: NCHW, 4-channel (RGBY)
    x = jax.random.normal(k_x, (2, 4, 16, 16), jnp.float32)

    out = resnet_forward(params, x)
    out = jax.block_until_ready(out)

    # 16x16 input -> conv/2 -> pool/2 -> layer2 /2 -> layer3 /2 -> layer4 /2 => 1x1, 512 ch
    assert out.shape == (2, 512, 1, 1), out.shape
    assert out.dtype == jnp.float32
    assert bool(jnp.all(jnp.isfinite(out)))

    ref = _forward(params, x, _conv_bn_act_ref, _maxpool_ref)
    ref = jax.block_until_ready(ref)
    max_err = float(jnp.max(jnp.abs(out - ref)))
    assert bool(jnp.allclose(out, ref, rtol=2e-2, atol=2e-2)), f"max abs err {max_err}"

    print("KERNEL_OK")
</pallas_src>

<mosaic_0001>
module attributes {stable_mosaic.version = 11 : i64} {
  func.func @_conv_kernel(%arg0: i32, %arg1: i32, %arg2: memref<1x1x64x196xbf16, #tpu.memory_space<vmem>>, %arg3: memref<1x196x64xbf16, #tpu.memory_space<vmem>>, %arg4: memref<1x64xf32, #tpu.memory_space<vmem>>, %arg5: memref<1x64xf32, #tpu.memory_space<vmem>>, %arg6: memref<1x64xf32, #tpu.memory_space<vmem>>, %arg7: memref<1x64x64xbf16, #tpu.memory_space<vmem>>) attributes {dimension_semantics = [#tpu.dimension_semantics<parallel>, #tpu.dimension_semantics<parallel>], iteration_bounds = array<i64: 2, 1>, scalar_prefetch = 0 : i64, scratch_operands = 0 : i64, tpu.core_type = #tpu.core_type<tc>, window_params = [{transform_indices = @transform_0, window_bounds = array<i64: 1, 1, 64, 196>}, {pipeline_mode = #tpu.pipeline_mode<synchronous>, transform_indices = @transform_1, window_bounds = array<i64: 1, 196, 64>}, {pipeline_mode = #tpu.pipeline_mode<synchronous>, transform_indices = @transform_2, window_bounds = array<i64: 1, 64>}, {pipeline_mode = #tpu.pipeline_mode<synchronous>, transform_indices = @transform_3, window_bounds = array<i64: 1, 64>}, {pipeline_mode = #tpu.pipeline_mode<synchronous>, transform_indices = @transform_4, window_bounds = array<i64: 1, 64>}, {transform_indices = @transform_5, window_bounds = array<i64: 1, 64, 64>}]} {
    %c0 = arith.constant 0 : index
    %c0_0 = arith.constant 0 : index
    %c0_1 = arith.constant 0 : index
    %c0_2 = arith.constant 0 : index
    %0 = vector.load %arg2[%c0, %c0_0, %c0_1, %c0_2] : memref<1x1x64x196xbf16, #tpu.memory_space<vmem>>, vector<1x1x64x196xbf16>
    %1 = vector.shape_cast %0 : vector<1x1x64x196xbf16> to vector<64x196xbf16>
    %c0_3 = arith.constant 0 : index
    %c0_4 = arith.constant 0 : index
    %c0_5 = arith.constant 0 : index
    %2 = vector.load %arg3[%c0_3, %c0_4, %c0_5] : memref<1x196x64xbf16, #tpu.memory_space<vmem>>, vector<1x196x64xbf16>
    %3 = vector.shape_cast %2 : vector<1x196x64xbf16> to vector<196x64xbf16>
    %cst = arith.constant dense<0.000000e+00> : vector<64x64xf32>
    %4 = tpu.matmul %1, %3, %cst {dimension_numbers = #tpu.dot_dimension_numbers<[1], [0], [0], [1], [0, 0, 1, 1], [], []>} : vector<64x196xbf16>, vector<196x64xbf16>, vector<64x64xf32> -> vector<64x64xf32>
    %c0_6 = arith.constant 0 : index
    %c0_7 = arith.constant 0 : index
    %5 = vector.load %arg6[%c0_6, %c0_7] : memref<1x64xf32, #tpu.memory_space<vmem>>, vector<1x64xf32>
    %6 = vector.broadcast %5 : vector<1x64xf32> to vector<64x64xf32>
    %7 = arith.addf %4, %6 : vector<64x64xf32>
    %cst_8 = arith.constant 0.000000e+00 : f32
    %8 = vector.broadcast %cst_8 : f32 to vector<64x64xf32>
    %9 = arith.maximumf %7, %8 : vector<64x64xf32>
    %c0_9 = arith.constant 0 : index
    %c0_10 = arith.constant 0 : index
    %10 = vector.load %arg4[%c0_9, %c0_10] : memref<1x64xf32, #tpu.memory_space<vmem>>, vector<1x64xf32>
    %11 = vector.broadcast %10 : vector<1x64xf32> to vector<64x64xf32>
    %12 = arith.mulf %9, %11 : vector<64x64xf32>
    %c0_11 = arith.constant 0 : index
    %c0_12 = arith.constant 0 : index
    %13 = vector.load %arg5[%c0_11, %c0_12] : memref<1x64xf32, #tpu.memory_space<vmem>>, vector<1x64xf32>
    %14 = vector.broadcast %13 : vector<1x64xf32> to vector<64x64xf32>
    %15 = arith.addf %12, %14 : vector<64x64xf32>
    %16 = arith.truncf %15 : vector<64x64xf32> to vector<64x64xbf16>
    %c0_13 = arith.constant 0 : index
    %c0_14 = arith.constant 0 : index
    %c0_15 = arith.constant 0 : index
    %17 = vector.load %arg7[%c0_13, %c0_14, %c0_15] : memref<1x64x64xbf16, #tpu.memory_space<vmem>>, vector<1x64x64xbf16>
    %18 = vector.shape_cast %17 : vector<1x64x64xbf16> to vector<64x64xbf16>
    %19 = vector.shape_cast %16 : vector<64x64xbf16> to vector<1x64x64xbf16>
    tpu.vector_store %arg7[%c0_13, %c0_14, %c0_15], %19 {strides = array<i32>} : memref<1x64x64xbf16, #tpu.memory_space<vmem>>, vector<1x64x64xbf16>,
    return
  }
  func.func @transform_0(%arg0: i32, %arg1: i32) -> (i32, i32, i32, i32) {
    %c0_i32 = arith.constant 0 : i32
    %c0_i32_0 = arith.constant 0 : i32
    %c0_i32_1 = arith.constant 0 : i32
    %c0_i32_2 = arith.constant 0 : i32
    return %arg0, %c0_i32, %c0_i32_0, %c0_i32_1 : i32, i32, i32, i32
  }
  func.func @transform_1(%arg0: i32, %arg1: i32) -> (i32, i32, i32) {
    %c0_i32 = arith.constant 0 : i32
    %c0_i32_0 = arith.constant 0 : i32
    %c0_i32_1 = arith.constant 0 : i32
    %c0_i32_2 = arith.constant 0 : i32
    return %c0_i32, %c0_i32_0, %c0_i32_1 : i32, i32, i32
  }
  func.func @transform_2(%arg0: i32, %arg1: i32) -> (i32, i32) {
    %c0_i32 = arith.constant 0 : i32
    %c0_i32_0 = arith.constant 0 : i32
    %c0_i32_1 = arith.constant 0 : i32
    return %c0_i32, %c0_i32_0 : i32, i32
  }
  func.func @transform_3(%arg0: i32, %arg1: i32) -> (i32, i32) {
    %c0_i32 = arith.constant 0 : i32
    %c0_i32_0 = arith.constant 0 : i32
    %c0_i32_1 = arith.constant 0 : i32
    return %c0_i32, %c0_i32_0 : i32, i32
  }
  func.func @transform_4(%arg0: i32, %arg1: i32) -> (i32, i32) {
    %c0_i32 = arith.constant 0 : i32
    %c0_i32_0 = arith.constant 0 : i32
    %c0_i32_1 = arith.constant 0 : i32
    return %c0_i32, %c0_i32_0 : i32, i32
  }
  func.func @transform_5(%arg0: i32, %arg1: i32) -> (i32, i32, i32) {
    %c0_i32 = arith.constant 0 : i32
    %c0_i32_0 = arith.constant 0 : i32
    return %arg0, %arg1, %c0_i32 : i32, i32, i32
  }
}

</mosaic_0001>

<llo_original>
// kernel: tpu_custom_call.1
$region0: #{tpu_custom_call.1}
  #allocation0 [shape = 'u32[]', space=smem, size = 0x4, offset = 0x4, fixed_abs, tag = 'smem constant byte address 0x4 - core index']
  #allocation1 [shape = 'u32[72,128]{1,0:T(1,128)}', space=vmem, size = 0x9000, scoped, tag = 'internal scratch']
  %s0 = inlined_call_operand.vmem [shape: bf16[2,1,64,196], index: 0, kind: input, shape index: {}]
  %s1 = inlined_call_operand.vmem [shape: bf16[1,196,64], index: 1, kind: input, shape index: {}]
  %s2 = inlined_call_operand.vmem [shape: f32[1,64], index: 2, kind: input, shape index: {}]
  %s3 = inlined_call_operand.vmem [shape: f32[1,64], index: 3, kind: input, shape index: {}]
  %s4 = inlined_call_operand.vmem [shape: f32[1,64], index: 4, kind: input, shape index: {}]
  %s5 = inlined_call_operand.hbm [shape: bf16[2,64,64], index: 5, kind: output, shape index: {}]
  %s6 = sld [smem:[#allocation0]]
  $region53: #{tpu_custom_call.1} parent=0
    _
  %s8 = ssub.s32 1, %s6
  %s9 = scalar_select 0, %s8, %s6
  $region1: #{tpu_custom_call.1} parent=0
    #allocation2 [shape = 'u8[32768]{0}', space=vmem, size = 0x8000, scoped, tag = 'output window, operand 0']
    #allocation3 [shape = 's32[2]{0}', space=sflag, size = 0x8, scoped, tag = 'scoped memory for tpu_custom_call.1']
    %10 = vsyncpa [#allocation3], 0
    %s11 = scalar_lea.sflag [#allocation3], 1
    %12 = vsyncpa %s11, 0
    loop: start=0, step=1, limit=4
    $region2: #{tpu_custom_call.1} parent=1 // loop_pre_header
      _
    $region3: #{tpu_custom_call.1} parent=1 // loop_header
      %s14 = sphi 0, %s18
      %p15 = scmp.ge.s32.totalorder %s14, 4
      %s21 = sphi 0, %s33
      %s22 = sphi 0, %s29
      %s23 = sphi 0, %s21
      %s24 = sphi 0, %s22
      %s25 = sphi 0, %s23
      %s26 = sphi 0, %s24
      %s36 = sphi 0, %s38
      %s39 = sphi 0, %s36
      %s40 = sphi 0, %s39
      %s56 = sphi 0, %s40
      %s60 = sphi 0, %s60
      %s62 = sphi 0, %s60
      %s63 = sphi 0, %s62
      %s77 = sphi 0, %s63
      %s81 = sphi 0, %s81
      %s83 = sphi 0, %s81
      %s84 = sphi 0, %s83
      %s98 = sphi 0, %s84
      %s102 = sphi 0, %s102
      %s104 = sphi 0, %s102
      %s105 = sphi 0, %s104
      %s119 = sphi 0, %s105
      %s123 = sphi 0, %s123
      %s125 = sphi 0, %s123
      %s126 = sphi 0, %s125
      %s140 = sphi 0, %s126
      %s148 = sphi 0, %s150
      %s151 = sphi 0, %s148
      %s152 = sphi 0, %s151
      %s168 = sphi 0, %s152
    $region4: #{tpu_custom_call.1} parent=1 // loop_header_branch
      %17 = sbr.rel (%p15) target = $region8
    $region5: #{tpu_custom_call.1} parent=1 // loop_body
      %s19 = ssub.s32 %s14, 1
      %s20 = ssub.s32 %s14, 2
      %s27 = sadd.s32 1, %s22
      %p28 = scmp.ge.s32.totalorder %s27, 1
      %s29 = scalar_select %p28, 0, %s27
      %s30 = sadd.s32 1, %s21
      %s31 = scalar_select %p28, %s30, %s21
      %p32 = scmp.ge.s32.totalorder %s31, 2
      %s33 = scalar_select %p32, 0, %s31
      %s34 = ssub.s32 %s21, %s33
      %p35 = scmp.eq.s32.totalorder %s34, 0
      %s37 = sadd.s32 %s36, 1
      %s38 = scalar_select %p35, %s36, %s37
      %p41 = pneg %p35
      %p42 = scmp.eq.s32.totalorder %s14, 1
      %p43 = por %p41, %p42
      %p44 = scmp.ne.s32.totalorder %s36, %s39
      %p45 = scmp.eq.s32.totalorder %s14, 0
      %p46 = por %p44, %p45
      %p47 = scmp.ne.s32.totalorder %s36, %s39
      %p48 = scmp.eq.s32.totalorder %s19, 1
      %p49 = por %p47, %p48
      %p50 = scmp.ne.s32.totalorder %s39, %s40
      %p51 = scmp.eq.s32.totalorder %s19, 0
      %p52 = por %p50, %p51
      %p53 = scmp.ne.s32.totalorder %s39, %s40
      %p54 = scmp.eq.s32.totalorder %s20, 1
      %p55 = por %p53, %p54
      %p57 = scmp.ne.s32.totalorder %s40, %s56
      %p58 = scmp.eq.s32.totalorder %s20, 0
      %p59 = por %p57, %p58
      %s61 = sadd.s32 %s60, 1
      %p64 = scmp.eq.s32.totalorder %s14, 1
      %p65 = scmp.ne.s32.totalorder %s60, %s62
      %p66 = scmp.eq.s32.totalorder %s14, 0
      %p67 = por %p65, %p66
      %p68 = scmp.ne.s32.totalorder %s60, %s62
      %p69 = scmp.eq.s32.totalorder %s19, 1
      %p70 = por %p68, %p69
      %p71 = scmp.ne.s32.totalorder %s62, %s63
      %p72 = scmp.eq.s32.totalorder %s19, 0
      %p73 = por %p71, %p72
      %p74 = scmp.ne.s32.totalorder %s62, %s63
      %p75 = scmp.eq.s32.totalorder %s20, 1
      %p76 = por %p74, %p75
      %p78 = scmp.ne.s32.totalorder %s63, %s77
      %p79 = scmp.eq.s32.totalorder %s20, 0
      %p80 = por %p78, %p79
      %s82 = sadd.s32 %s81, 1
      %p85 = scmp.eq.s32.totalorder %s14, 1
      %p86 = scmp.ne.s32.totalorder %s81, %s83
      %p87 = scmp.eq.s32.totalorder %s14, 0
      %p88 = por %p86, %p87
      %p89 = scmp.ne.s32.totalorder %s81, %s83
      %p90 = scmp.eq.s32.totalorder %s19, 1
      %p91 = por %p89, %p90
      %p92 = scmp.ne.s32.totalorder %s83, %s84
      %p93 = scmp.eq.s32.totalorder %s19, 0
      %p94 = por %p92, %p93
      %p95 = scmp.ne.s32.totalorder %s83, %s84
      %p96 = scmp.eq.s32.totalorder %s20, 1
      %p97 = por %p95, %p96
      %p99 = scmp.ne.s32.totalorder %s84, %s98
      %p100 = scmp.eq.s32.totalorder %s20, 0
      %p101 = por %p99, %p100
      %s103 = sadd.s32 %s102, 1
      %p106 = scmp.eq.s32.totalorder %s14, 1
      %p107 = scmp.ne.s32.totalorder %s102, %s104
      %p108 = scmp.eq.s32.totalorder %s14, 0
      %p109 = por %p107, %p108
      %p110 = scmp.ne.s32.totalorder %s102, %s104
      %p111 = scmp.eq.s32.totalorder %s19, 1
      %p112 = por %p110, %p111
      %p113 = scmp.ne.s32.totalorder %s104, %s105
      %p114 = scmp.eq.s32.totalorder %s19, 0
      %p115 = por %p113, %p114
      %p116 = scmp.ne.s32.totalorder %s104, %s105
      %p117 = scmp.eq.s32.totalorder %s20, 1
      %p118 = por %p116, %p117
      %p120 = scmp.ne.s32.totalorder %s105, %s119
      %p121 = scmp.eq.s32.totalorder %s20, 0
      %p122 = por %p120, %p121
      %s124 = sadd.s32 %s123, 1
      %p127 = scmp.eq.s32.totalorder %s14, 1
      %p128 = scmp.ne.s32.totalorder %s123, %s125
      %p129 = scmp.eq.s32.totalorder %s14, 0
      %p130 = por %p128, %p129
      %p131 = scmp.ne.s32.totalorder %s123, %s125
      %p132 = scmp.eq.s32.totalorder %s19, 1
      %p133 = por %p131, %p132
      %p134 = scmp.ne.s32.totalorder %s125, %s126
      %p135 = scmp.eq.s32.totalorder %s19, 0
      %p136 = por %p134, %p135
      %p137 = scmp.ne.s32.totalorder %s125, %s126
      %p138 = scmp.eq.s32.totalorder %s20, 1
      %p139 = por %p137, %p138
      %p141 = scmp.ne.s32.totalorder %s126, %s140
      %p142 = scmp.eq.s32.totalorder %s20, 0
      %p143 = por %p141, %p142
      %s144 = ssub.s32 %s21, %s33
      %s145 = ssub.s32 %s22, %s29
      %s146 = sor.u32 %s144, %s145
      %p147 = scmp.eq.s32.totalorder %s146, 0
      %s149 = sadd.s32 %s148, 1
      %s150 = scalar_select %p147, %s148, %s149
      %p153 = pneg %p147
      %p154 = scmp.eq.s32.totalorder %s14, 1
      %p155 = por %p153, %p154
      %p156 = scmp.ne.s32.totalorder %s148, %s151
      %p157 = scmp.eq.s32.totalorder %s14, 0
      %p158 = por %p156, %p157
      %p159 = scmp.ne.s32.totalorder %s148, %s151
      %p160 = scmp.eq.s32.totalorder %s19, 1
      %p161 = por %p159, %p160
      %p162 = scmp.ne.s32.totalorder %s151, %s152
      %p163 = scmp.eq.s32.totalorder %s19, 0
      %p164 = por %p162, %p163
      %p165 = scmp.ne.s32.totalorder %s151, %s152
      %p166 = scmp.eq.s32.totalorder %s20, 1
      %p167 = por %p165, %p166
      %p169 = scmp.ne.s32.totalorder %s152, %s168
      %p170 = scmp.eq.s32.totalorder %s20, 0
      %p171 = por %p169, %p170
      %p172 = scmp.le.s32.totalorder 1, %s14
      %p173 = scmp.lt.s32.totalorder %s14, 3
      %p174 = pnand %p172, %p173
      %p175 = pneg %p174
      // Predicated region
      $region9: #{tpu_custom_call.1} parent=5 // pred_check
        _
      $region10: #{tpu_custom_call.1} parent=5 // pred_check_branch
        %177 = sbr.rel (%p174) target = $region12
      $region11: #{tpu_custom_call.1} parent=5 // pred_region
        %s178 = ssub.s32 %s14, 1
        // Predicated region
        $region13: #{tpu_custom_call.1} parent=11 // pred_check
          %p179 = pneg %p73
        $region14: #{tpu_custom_call.1} parent=11 // pred_check_branch
          %181 = sbr.rel (%p179) target = $region16
        $region15: #{tpu_custom_call.1} parent=11 // pred_region
          _
        $region16: #{tpu_custom_call.1} parent=11 // pred_fallthru
          _
        // Predicated region
        $region17: #{tpu_custom_call.1} parent=11 // pred_check
          %p182 = pneg %p94
        $region18: #{tpu_custom_call.1} parent=11 // pred_check_branch
          %184 = sbr.rel (%p182) target = $region20
        $region19: #{tpu_custom_call.1} parent=11 // pred_region
          _
        $region20: #{tpu_custom_call.1} parent=11 // pred_fallthru
          _
        // Predicated region
        $region21: #{tpu_custom_call.1} parent=11 // pred_check
          %p185 = pneg %p115
        $region22: #{tpu_custom_call.1} parent=11 // pred_check_branch
          %187 = sbr.rel (%p185) target = $region24
        $region23: #{tpu_custom_call.1} parent=11 // pred_region
          _
        $region24: #{tpu_custom_call.1} parent=11 // pred_fallthru
          _
        // Predicated region
        $region25: #{tpu_custom_call.1} parent=11 // pred_check
          %p188 = pneg %p136
        $region26: #{tpu_custom_call.1} parent=11 // pred_check_branch
          %190 = sbr.rel (%p188) target = $region28
        $region27: #{tpu_custom_call.1} parent=11 // pred_region
          _
        $region28: #{tpu_custom_call.1} parent=11 // pred_fallthru
          _
      $region12: #{tpu_custom_call.1} parent=5 // pred_fallthru
        _
      %p191 = scmp.lt.s32.totalorder %s14, 2
      // Predicated region
      $region29: #{tpu_custom_call.1} parent=5 // pred_check
        %p192 = pneg %p191
      $region30: #{tpu_custom_call.1} parent=5 // pred_check_branch
        %194 = sbr.rel (%p192) target = $region32
      $region31: #{tpu_custom_call.1} parent=5 // pred_region
        // Predicated region
        $region33: #{tpu_custom_call.1} parent=31 // pred_check
          %p195 = pneg %p46
        $region34: #{tpu_custom_call.1} parent=31 // pred_check_branch
          %197 = sbr.rel (%p195) target = $region36
        $region35: #{tpu_custom_call.1} parent=31 // pred_region
          %p198 = scmp.lt.s32.totalorder %s21, 1
          %s199 = scalar_select %p198, %s21, 1
          %s200 = smul.addr %s199, 16
          %s201 = smul.addr %s200, 4
          %s202 = scalar_lea.vmem %s0, %s201
        $region36: #{tpu_custom_call.1} parent=31 // pred_fallthru
          _
      $region32: #{tpu_custom_call.1} parent=5 // pred_fallthru
        _
      %p203 = scmp.le.s32.totalorder 1, %s14
      %p204 = scmp.lt.s32.totalorder %s14, 3
      %p205 = pnand %p203, %p204
      %p206 = pneg %p205
      // Predicated region
      $region37: #{tpu_custom_call.1} parent=5 // pred_check
        _
      $region38: #{tpu_custom_call.1} parent=5 // pred_check_branch
        %208 = sbr.rel (%p205) target = $region40
      $region39: #{tpu_custom_call.1} parent=5 // pred_region
        %s209 = ssub.s32 %s14, 1
        %p210 = scmp.lt.s32.totalorder %s23, 1
        %s211 = scalar_select %p210, %s23, 1
        %s212 = smul.addr %s211, 16
        %s213 = smul.addr %s212, 4
        %s214 = scalar_lea.vmem %s0, %s213
        %p215 = pneg %p52
        %p216 = pneg %p49
        %p217 = pneg %p73
        %p218 = pneg %p70
        %p219 = pneg %p94
        %p220 = pneg %p91
        %p221 = pneg %p115
        %p222 = pneg %p112
        %p223 = pneg %p136
        %p224 = pneg %p133
        %p225 = pneg %p164
        %p226 = pneg %p161
        %s227 = sand.u32 %s151, 1
        %s228 = scalar_lea.sflag [#allocation3], %s227
        %s229 = sand.u32 %s151, 1
        %s230 = smul.addr %s229, 32
        %s231 = scalar_lea.vmem [#allocation2], %s230
        %p232 = scmp.lt.s32.totalorder %s23, 1
        %s233 = scalar_select %p232, %s23, 1
        %s234 = smul.addr %s233, 16
        %s235 = smul.addr %s234, 4
        %s236 = scalar_lea.vmem %s0, %s235
        %s237 = smul.u32 8, %s24
        %v239 = vld [vmem:[%s236] sm:$0xff]
        %v240 = vld [vmem:[%s236 + $0x8] sm:$0xff]
        %v241 = vld [vmem:[%s236 + $0x10] sm:$0xff]
        %v242 = vld [vmem:[%s236 + $0x18] sm:$0xff]
        %v243 = vld [vmem:[%s236 + $0x20] sm:$0xff]
        %v244 = vld [vmem:[%s236 + $0x28] sm:$0xff]
        %v245 = vld [vmem:[%s236 + $0x30] sm:$0xff]
        %v246 = vld [vmem:[%s236 + $0x38] sm:$0xff]
        %v247 = vld [vmem:[%s1] sm:$0xf]
        %v248 = vld [vmem:[%s1 + $0x4] sm:$0xf]
        %v249 = vld [vmem:[%s1 + $0x8] sm:$0xf]
        %v250 = vld [vmem:[%s1 + $0xc] sm:$0xf]
        %v251 = vld [vmem:[%s1 + $0x10] sm:$0xf]
        %v252 = vld [vmem:[%s1 + $0x14] sm:$0xf]
        %v253 = vld [vmem:[%s1 + $0x18] sm:$0xf]
        %v254 = vld [vmem:[%s1 + $0x1c] sm:$0xf]
        %v255 = vld [vmem:[%s1 + $0x20] sm:$0xf]
        %v256 = vld [vmem:[%s1 + $0x24] sm:$0xf]
        %v257 = vld [vmem:[%s1 + $0x28] sm:$0xf]
        %v258 = vld [vmem:[%s1 + $0x2c] sm:$0xf]
        %v259 = vld [vmem:[%s1 + $0x30] sm:$0xf]
        %v260 = vld [vmem:[%s1 + $0x34] sm:$0xf]
        %v261 = vld [vmem:[%s1 + $0x38] sm:$0xf]
        %v262 = vld [vmem:[%s1 + $0x3c] sm:$0xf]
        %v263 = vld [vmem:[%s1 + $0x40] sm:$0xf]
        %v264 = vld [vmem:[%s1 + $0x44] sm:$0xf]
        %v265 = vld [vmem:[%s1 + $0x48] sm:$0xf]
        %v266 = vld [vmem:[%s1 + $0x4c] sm:$0xf]
        %v267 = vld [vmem:[%s1 + $0x50] sm:$0xf]
        %v268 = vld [vmem:[%s1 + $0x54] sm:$0xf]
        %v269 = vld [vmem:[%s1 + $0x58] sm:$0xf]
        %v270 = vld [vmem:[%s1 + $0x5c] sm:$0xf]
        %v271 = vld [vmem:[%s1 + $0x60] sm:$0x3]
        %v272 = vld [vmem:[%s4] sm:$0x1]
        %v274 = vperm.slane %v272, 0
        %v284 = vunpack.c.l.b16 %v239
        %v285 = vunpack.c.h.b16 %v239
        %v286 = vunpack.c.l.b16 %v240
        %v287 = vunpack.c.h.b16 %v240
        %v288 = vunpack.c.l.b16 %v241
        %v289 = vunpack.c.h.b16 %v241
        %v290 = vunpack.c.l.b16 %v242
        %v291 = vunpack.c.h.b16 %v242
        %v292 = vunpack.c.l.b16 %v243
        %v293 = vunpack.c.h.b16 %v243
        %v294 = vunpack.c.l.b16 %v244
        %v295 = vunpack.c.h.b16 %v244
        %v296 = vunpack.c.l.b16 %v245
        %v297 = vunpack.c.h.b16 %v245
        %v298 = vunpack.c.l.b16 %v246
        %v299 = vunpack.c.h.b16 %v246
        %v300 = vpack.c.b16 %v286, %v284
        %v301 = vpack.c.b16 %v287, %v285
        %v302 = vpack.c.b16 %v290, %v288
        %v303 = vpack.c.b16 %v291, %v289
        %v304 = vpack.c.b16 %v294, %v292
        %v305 = vpack.c.b16 %v295, %v293
        %v306 = vpack.c.b16 %v298, %v296
        %v307 = vpack.c.b16 %v299, %v297
        %v337 = vunpack.c.l.b16 %v247
        %v338 = vunpack.c.l.b16 %v248
        %v339 = vunpack.c.l.b16 %v249
        %v340 = vunpack.c.l.b16 %v250
        %v341 = vunpack.c.l.b16 %v251
        %v342 = vunpack.c.l.b16 %v252
        %v343 = vunpack.c.l.b16 %v253
        %v344 = vunpack.c.l.b16 %v254
        %v345 = vunpack.c.l.b16 %v255
        %v346 = vunpack.c.l.b16 %v256
        %v347 = vunpack.c.l.b16 %v257
        %v348 = vunpack.c.l.b16 %v258
        %v349 = vunpack.c.l.b16 %v259
        %v350 = vunpack.c.l.b16 %v260
        %v351 = vunpack.c.l.b16 %v261
        %v352 = vunpack.c.l.b16 %v262
        %v353 = vunpack.c.l.b16 %v263
        %v354 = vunpack.c.l.b16 %v264
        %v355 = vunpack.c.l.b16 %v265
        %v356 = vunpack.c.l.b16 %v266
        %v357 = vunpack.c.l.b16 %v267
        %v358 = vunpack.c.l.b16 %v268
        %v359 = vunpack.c.l.b16 %v269
        %v360 = vunpack.c.l.b16 %v270
        %v361 = vunpack.c.l.b16 %v271
        %v362 = vpack.c.b16 %v338, %v337
        %v363 = vpack.c.b16 %v340, %v339
        %v364 = vpack.c.b16 %v342, %v341
        %v365 = vpack.c.b16 %v344, %v343
        %v366 = vpack.c.b16 %v346, %v345
        %v367 = vpack.c.b16 %v348, %v347
        %v368 = vpack.c.b16 %v350, %v349
        %v369 = vpack.c.b16 %v352, %v351
        %v370 = vpack.c.b16 %v354, %v353
        %v371 = vpack.c.b16 %v356, %v355
        %v372 = vpack.c.b16 %v358, %v357
        %v373 = vpack.c.b16 %v360, %v359
        %v374 = vpack.c.b16 %v361, %v361
        %vm387 = vcmask 556032
        %v389 = vsel %vm387, %v301, 0
        %v392 = vsel %vm387, %v303, 0
        %v395 = vsel %vm387, %v305, 0
        %v398 = vsel %vm387, %v307, 0
        %vm400 = vcmask 1041408
        %v402 = vsel %vm400, %v374, 0
        %404 = vmatpush.bf16.msra.mxu0 %v369
        %405 = vmatpush.bf16.msra.mxu0 %v368
        %406 = vmatpush.bf16.msra.mxu0 %v367
        %407 = vmatpush.bf16.msra.mxu0 %v366
        %408 = vmatpush.bf16.msra.mxu0 %v365
        %409 = vmatpush.bf16.msra.mxu0 %v364
        %410 = vmatpush.bf16.msra.mxu0 %v363
        %411 = vmatpush.bf16.msra.mxu0 %v362
        %412 = vmatmul.bf16.gmra.mxu0 %v300
        %v413 = vpop.f32.mrf.mxu0
        %v414 = vadd.f32 %v274, %v413
        %v415 = vpop.f32.mrf.mxu0
        %v416 = vadd.f32 %v274, %v415
        %417 = vmatmul.bf16.gmra.mxu0 %v302
        %v418 = vpop.f32.mrf.mxu0
        %v419 = vadd.f32 %v274, %v418
        %v420 = vpop.f32.mrf.mxu0
        %v421 = vadd.f32 %v274, %v420
        %422 = vmatmul.bf16.gmra.mxu0 %v304
        %v423 = vpop.f32.mrf.mxu0
        %v424 = vadd.f32 %v274, %v423
        %v425 = vpop.f32.mrf.mxu0
        %v426 = vadd.f32 %v274, %v425
        %427 = vmatmul.bf16.gmra.mxu0 %v306
        %v428 = vpop.f32.mrf.mxu0
        %v429 = vadd.f32 %v274, %v428
        %v430 = vpop.f32.mrf.mxu0
        %v431 = vadd.f32 %v274, %v430
        %432 = vdwg.mxu0
        %433 = vmatpush.bf16.msra.mxu0 0
        %434 = vmatpush.bf16.msra.mxu0 0
        %435 = vmatpush.bf16.msra.mxu0 0
        %436 = vmatpush.bf16.msra.mxu0 %v402
        %437 = vmatpush.bf16.msra.mxu0 %v373
        %438 = vmatpush.bf16.msra.mxu0 %v372
        %439 = vmatpush.bf16.msra.mxu0 %v371
        %440 = vmatpush.bf16.msra.mxu0 %v370
        %441 = vmatmul.bf16.gmra.mxu0 %v389
        %v442 = vpop.f32.mrf.mxu0
        %v443 = vadd.f32 %v414, %v442
        %v444 = vpop.f32.mrf.mxu0
        %v445 = vadd.f32 %v416, %v444
        %446 = vmatmul.bf16.gmra.mxu0 %v392
        %v447 = vpop.f32.mrf.mxu0
        %v448 = vadd.f32 %v419, %v447
        %v449 = vpop.f32.mrf.mxu0
        %v450 = vadd.f32 %v421, %v449
        %451 = vmatmul.bf16.gmra.mxu0 %v395
        %v452 = vpop.f32.mrf.mxu0
        %v453 = vadd.f32 %v424, %v452
        %v454 = vpop.f32.mrf.mxu0
        %v455 = vadd.f32 %v426, %v454
        %456 = vmatmul.bf16.gmra.mxu0 %v398
        %v457 = vpop.f32.mrf.mxu0
        %v458 = vadd.f32 %v429, %v457
        %v459 = vpop.f32.mrf.mxu0
        %v460 = vadd.f32 %v431, %v459
        %461 = vdwg.mxu0
        %v462 = vmax.f32 %v443, 0.0
        %v463 = vmax.f32 %v445, 0.0
        %v464 = vmax.f32 %v448, 0.0
        %v465 = vmax.f32 %v450, 0.0
        %v466 = vmax.f32 %v453, 0.0
        %v467 = vmax.f32 %v455, 0.0
        %v468 = vmax.f32 %v458, 0.0
        %v469 = vmax.f32 %v460, 0.0
        %v470 = vld [vmem:[%s2] sm:$0x1]
        %v472 = vperm.slane %v470, 0
        %v474 = vmul.f32 %v462, %v472
        %v475 = vmul.f32 %v463, %v472
        %v476 = vmul.f32 %v464, %v472
        %v477 = vmul.f32 %v465, %v472
        %v478 = vmul.f32 %v466, %v472
        %v479 = vmul.f32 %v467, %v472
        %v480 = vmul.f32 %v468, %v472
        %v481 = vmul.f32 %v469, %v472
        %v482 = vld [vmem:[%s3] sm:$0x1]
        %v484 = vperm.slane %v482, 0
        %v486 = vadd.f32 %v474, %v484
        %v487 = vadd.f32 %v475, %v484
        %v488 = vadd.f32 %v476, %v484
        %v489 = vadd.f32 %v477, %v484
        %v490 = vadd.f32 %v478, %v484
        %v491 = vadd.f32 %v479, %v484
        %v492 = vadd.f32 %v480, %v484
        %v493 = vadd.f32 %v481, %v484
        %v494 = vpack.c.bf16 %v486, %v486
        %v495 = vpack.c.bf16 %v487, %v487
        %v496 = vpack.c.bf16 %v488, %v488
        %v497 = vpack.c.bf16 %v489, %v489
        %v498 = vpack.c.bf16 %v490, %v490
        %v499 = vpack.c.bf16 %v491, %v491
        %v500 = vpack.c.bf16 %v492, %v492
        %v501 = vpack.c.bf16 %v493, %v493
        %vm502 = vcmask 519168
        %503 = vst.msk [vmem:[%s231] sm:$0xf] %vm502, %v494
        %504 = vst.msk [vmem:[%s231 + $0x4] sm:$0xf] %vm502, %v495
        %505 = vst.msk [vmem:[%s231 + $0x8] sm:$0xf] %vm502, %v496
        %506 = vst.msk [vmem:[%s231 + $0xc] sm:$0xf] %vm502, %v497
        %507 = vst.msk [vmem:[%s231 + $0x10] sm:$0xf] %vm502, %v498
        %508 = vst.msk [vmem:[%s231 + $0x14] sm:$0xf] %vm502, %v499
        %509 = vst.msk [vmem:[%s231 + $0x18] sm:$0xf] %vm502, %v500
        %510 = vst.msk [vmem:[%s231 + $0x1c] sm:$0xf] %vm502, %v501
        %s511 = sand.u32 %s151, 1
        %s512 = scalar_lea.sflag [#allocation3], %s511
        %s513 = sand.u32 %s151, 1
        %s514 = smul.addr %s513, 32
        %s515 = scalar_lea.vmem [#allocation2], %s514
        // Predicated region
        $region41: #{tpu_custom_call.1} parent=39 // pred_check
          %p516 = pneg %p161
        $region42: #{tpu_custom_call.1} parent=39 // pred_check_branch
          %518 = sbr.rel (%p516) target = $region44
        $region43: #{tpu_custom_call.1} parent=39 // pred_region
          %s519 = smul.u32 8, %s24
          %521 = vsyncadd %s512, 0
          %s522 = smul.addr %s23, 8
          %s523 = sadd.s32 %s519, %s522
          %s524 = smul.addr %s523, 4
          %s525 = scalar_lea.hbm %s5, %s524
          %s526 = sshll.u32 %s515, 4
          %s527 = int_to_ptr.vmem [resolvable:$true] %s526
          %s528 = sshll.u32 %s525, 4
          %s529 = int_to_ptr.hbm [resolvable:$true] %s528
          %534 = dma.vmem_to_hbm [thread:$0]  %s527, 512, %s529, %s512, 64, 64, 4
        $region44: #{tpu_custom_call.1} parent=39 // pred_fallthru
          _
      $region40: #{tpu_custom_call.1} parent=5 // pred_fallthru
        _
      %p535 = scmp.le.s32.totalorder 2, %s14
      // Predicated region
      $region45: #{tpu_custom_call.1} parent=5 // pred_check
        %p536 = pneg %p535
      $region46: #{tpu_custom_call.1} parent=5 // pred_check_branch
        %538 = sbr.rel (%p536) target = $region48
      $region47: #{tpu_custom_call.1} parent=5 // pred_region
        %s539 = ssub.s32 %s14, 2
        // Predicated region
        $region49: #{tpu_custom_call.1} parent=47 // pred_check
          %p540 = pneg %p167
        $region50: #{tpu_custom_call.1} parent=47 // pred_check_branch
          %542 = sbr.rel (%p540) target = $region52
        $region51: #{tpu_custom_call.1} parent=47 // pred_region
          %s543 = sand.u32 %s152, 1
          %s544 = scalar_lea.sflag [#allocation3], %s543
          %s545 = sand.u32 %s152, 1
          %s546 = smul.addr %s545, 32
          %s547 = scalar_lea.vmem [#allocation2], %s546
          %549 = dma.done %s544, 512
        $region52: #{tpu_custom_call.1} parent=47 // pred_fallthru
          _
      $region48: #{tpu_custom_call.1} parent=5 // pred_fallthru
        _
    $region6: #{tpu_custom_call.1} parent=1 // loop_footer
      %s18 = sadd.s32 1, %s14
    $region7: #{tpu_custom_call.1} parent=1 // loop_footer_branch
      %13 = sbr.rel target = $region3
    $region8: #{tpu_custom_call.1} parent=1 // loop_exit
      _
    %550 = vsyncpa [#allocation3], 1
    %s551 = scalar_lea.sflag [#allocation3], 1
    %552 = vsyncpa %s551, 1

</llo_original>
